<compile_context>
chip_gen: v7x
topology: tpu7x:2x2x1
jax: 0.10.0
libtpu: 0.0.40
codegen_flags: <defaults>
</compile_context>

<pallas_src>
import jax
import jax.numpy as jnp
from jax.experimental import pallas as pl
from jax.experimental.pallas import tpu as pltpu


# --------------------------------------------------------------------------- kernel

def resblock_kernel(at_ref, xt_ref, wcat_ref, w1t_ref,
                    g0_ref, be0_ref, g1_ref, be1_ref, blt_ref,
                    o_ref,
                    lift_ref, t_ref, res_ref, h_ref, h2_ref, s1_ref, s2_ref):
    """Whole ResBlock in lane-dense [C, N] layout over a (phase, node_tile) grid.

    phase 0, tile j : h^T[:, tile_j]  = (x @ W0)^T        @ A_hat^T[:, tile_j]
    phase 1, tile j : h2^T[:, tile_j] = (relu(BN0(h))W1)^T @ A_hat^T[:, tile_j]
    BN statistics are accumulated per tile (one-pass sum / sum-of-squares); BN0+relu+W1
    lift happen once at the phase boundary, BN1+residual+relu once at the last step,
    with all narrow intermediates resident in VMEM scratch.
    """
    eps = 1e-5
    p = pl.program_id(0)
    j = pl.program_id(1)
    n_tiles = pl.num_programs(1)

    c_out, n = o_ref.shape
    tn = at_ref.shape[1]
    inv_n = 1.0 / n

    # ---- one-time x-side work (first grid step) -------------------------------------
    @pl.when(jnp.logical_and(p == 0, j == 0))
    def _():
        # Fused x-side matmul (W0 | Wl)^T @ x^T; the split is a sublane slice at an
        # 8-row boundary (no lane slicing at a non-128 boundary).
        pre = jnp.dot(wcat_ref[...], xt_ref[...].astype(jnp.bfloat16),
                      preferred_element_type=jnp.float32)              # [2*C_out, N]
        lift_ref[...] = pre[:c_out, :].astype(jnp.bfloat16)            # (x @ W0)^T
        res_ref[...] = pre[c_out:, :] + blt_ref[...]                   # (x @ Wl + bl)^T
        s1_ref[...] = jnp.zeros_like(s1_ref)
        s2_ref[...] = jnp.zeros_like(s2_ref)

    # ---- phase 0: GCNConv0 propagate for this column tile of A_hat^T ----------------
    @pl.when(p == 0)
    def _():
        h_tile = jnp.dot(lift_ref[...], at_ref[...],
                         preferred_element_type=jnp.float32)           # [C_out, tn]
        h_ref[j] = h_tile
        s1_ref[...] += jnp.sum(h_tile, axis=1, keepdims=True)
        s2_ref[...] += jnp.sum(h_tile * h_tile, axis=1, keepdims=True)

    # ---- phase boundary: BN0 (training-mode batch stats) + relu + W1 lift -----------
    @pl.when(jnp.logical_and(p == 1, j == 0))
    def _():
        mean = s1_ref[...] * inv_n
        var = jnp.maximum(s2_ref[...] * inv_n - mean * mean, 0.0)
        scale = g0_ref[...] * jax.lax.rsqrt(var + eps)
        shift = be0_ref[...] - mean * scale
        for k in range(h_ref.shape[0]):                                # static unroll
            hr_k = jnp.maximum(h_ref[k] * scale + shift, 0.0).astype(jnp.bfloat16)
            t_ref[:, k * tn:(k + 1) * tn] = jnp.dot(
                w1t_ref[...], hr_k,
                preferred_element_type=jnp.float32).astype(jnp.bfloat16)
        s1_ref[...] = jnp.zeros_like(s1_ref)    # reuse the accumulators for BN1
        s2_ref[...] = jnp.zeros_like(s2_ref)

    # ---- phase 1: GCNConv1 propagate for this column tile ---------------------------
    @pl.when(p == 1)
    def _():
        h2_tile = jnp.dot(t_ref[...], at_ref[...],
                          preferred_element_type=jnp.float32)          # [C_out, tn]
        h2_ref[j] = h2_tile
        s1_ref[...] += jnp.sum(h2_tile, axis=1, keepdims=True)
        s2_ref[...] += jnp.sum(h2_tile * h2_tile, axis=1, keepdims=True)

    # ---- finalize: BN1 + residual + relu into the lane-dense [C_out, N] output ------
    @pl.when(jnp.logical_and(p == 1, j == n_tiles - 1))
    def _():
        mean = s1_ref[...] * inv_n
        var = jnp.maximum(s2_ref[...] * inv_n - mean * mean, 0.0)
        scale = g1_ref[...] * jax.lax.rsqrt(var + eps)
        shift = be1_ref[...] - mean * scale
        for k in range(h2_ref.shape[0]):                               # static unroll
            o_ref[:, k * tn:(k + 1) * tn] = jnp.maximum(
                h2_ref[k] * scale + shift + res_ref[:, k * tn:(k + 1) * tn], 0.0)


# --------------------------------------------------------------------------- wrapper

def _pick_tile(n):
    """Largest 128-aligned column-tile size dividing N (falls back to whole array)."""
    for t in (512, 256, 128):
        if n % t == 0:
            return t
    return n


def _vmem_capacity_bytes():
    """Generation-aware physical VMEM size (v5e/v6e: 128 MiB, v7x: 64 MiB)."""
    try:
        cap = getattr(pltpu.get_tpu_info(), "vmem_capacity_bytes", None)
        if cap:
            return int(cap)
    except Exception:
        pass
    return 64 << 20   # conservative fallback = smallest current part (v7x)


def prepare_operands(a_hat, params):
    """One-time, per-graph/per-weight prep hoisted OUT of the per-call path:
    bf16 cast + transpose of A_hat, weight transposition / fusion / bf16 casts."""
    c_out = params["w0"].shape[1]
    return {
        # The kernel consumes A_hat^T (== A_hat for a symmetric normalized adjacency).
        "at": jnp.asarray(a_hat).T.astype(jnp.bfloat16),
        # Fused x-side weights, transposed: rows [0, C_out) = W0^T, rows [C_out, 2C_out) = Wl^T.
        "wcat_t": jnp.concatenate([params["w0"].T, params["wl"].T],
                                  axis=0).astype(jnp.bfloat16),
        "w1t": params["w1"].T.astype(jnp.bfloat16),
        "g0t": params["g0"].reshape(c_out, 1).astype(jnp.float32),
        "be0t": params["be0"].reshape(c_out, 1).astype(jnp.float32),
        "g1t": params["g1"].reshape(c_out, 1).astype(jnp.float32),
        "be1t": params["be1"].reshape(c_out, 1).astype(jnp.float32),
        "blt": params["bl"].reshape(c_out, 1).astype(jnp.float32),
    }


def resblock_forward(prep, x):
    """Fused ResBlock forward.  x: [N, C_in] f32 node features.  Returns [N, C_out] f32."""
    n, c_in = x.shape
    at = prep["at"]
    wcat_t, w1t = prep["wcat_t"], prep["w1t"]
    g0, be0, g1, be1, blt = (prep[k] for k in ("g0t", "be0t", "g1t", "be1t", "blt"))
    c_out = w1t.shape[0]
    assert at.shape == (n, n)

    xt = x.T                                    # [C_in, N]; negligible next to the N^2 A_hat

    tn = _pick_tile(n)
    num_tiles = n // tn

    full = lambda arr: pl.BlockSpec(arr.shape, lambda p, j: (0,) * arr.ndim)

    # Generation-aware scoped-VMEM limit: sized from the real footprint, capped well below
    # physical VMEM so compiler-internal scratch has headroom.
    est = (2 * n * tn * 2                           # double-buffered A_hat^T column blocks
           + 2 * c_in * n * 4                       # resident x^T
           + 2 * c_out * n * 4                      # resident output block
           + c_out * n * (2 + 2 + 4)                # lift / t (bf16) + residual (f32)
           + 2 * num_tiles * c_out * tn * 4         # h / h2 tile stacks
           + (2 << 20))                             # weights, BN vectors, slack
    vmem_limit = int(min(max(2 * est, 32 << 20), int(0.85 * _vmem_capacity_bytes())))

    out_t = pl.pallas_call(
        resblock_kernel,
        out_shape=jax.ShapeDtypeStruct((c_out, n), jnp.float32),
        grid_spec=pltpu.PrefetchScalarGridSpec(
            num_scalar_prefetch=0,
            grid=(2, num_tiles),                    # (phase, node tile)
            in_specs=[
                pl.BlockSpec((n, tn), lambda p, j: (0, j)),      # A_hat^T column tile
                full(xt), full(wcat_t), full(w1t),
                full(g0), full(be0), full(g1), full(be1), full(blt),
            ],
            out_specs=pl.BlockSpec((c_out, n), lambda p, j: (0, 0)),
            scratch_shapes=[
                pltpu.VMEM((c_out, n), jnp.bfloat16),             # lift = (x @ W0)^T
                pltpu.VMEM((c_out, n), jnp.bfloat16),             # t = (relu(BN0(h)) @ W1)^T
                pltpu.VMEM((c_out, n), jnp.float32),              # residual (x @ Wl + bl)^T
                pltpu.VMEM((num_tiles, c_out, tn), jnp.float32),  # h  (conv0 output tiles)
                pltpu.VMEM((num_tiles, c_out, tn), jnp.float32),  # h2 (conv1 output tiles)
                pltpu.VMEM((c_out, 1), jnp.float32),              # BN sum accumulator
                pltpu.VMEM((c_out, 1), jnp.float32),              # BN sum-of-squares acc
            ]),
        compiler_params=pltpu.CompilerParams(
            # Phases/tiles carry VMEM state sequentially -> both axes "arbitrary".
            dimension_semantics=("arbitrary", "arbitrary"),
            vmem_limit_bytes=vmem_limit),
    )(at, xt, wcat_t, w1t, g0, be0, g1, be1, blt)

    # Kernel emits lane-dense [C_out, N]; transpose only because the module's contract
    # is [N, C_out] — drop this if the consumer can take the transposed layout.
    return out_t.T


# --------------------------------------------------------------------------- setup / ref

def build_normalized_adjacency(edge_index, num_nodes):
    """A_hat = D^-1/2 (A + I) D^-1/2 (GCNConv default: add_self_loops, symmetric norm)."""
    src, dst = edge_index
    a = jnp.zeros((num_nodes, num_nodes), jnp.float32).at[dst, src].set(1.0)
    a = a + jnp.eye(num_nodes, dtype=jnp.float32)
    deg = jnp.sum(a, axis=1)
    d_inv_sqrt = jnp.where(deg > 0, 1.0 / jnp.sqrt(deg), 0.0)
    return a * d_inv_sqrt[:, None] * d_inv_sqrt[None, :]


def init_params(key, c_in, c_out):
    ks = jax.random.split(key, 4)
    s_in = 1.0 / jnp.sqrt(c_in)
    s_out = 1.0 / jnp.sqrt(c_out)
    return {
        # GCNConv weights.  GCNConv biases are omitted on purpose: added right before a
        # training-mode BatchNorm they cancel exactly in the mean subtraction.
        "w0": jax.random.uniform(ks[0], (c_in, c_out), jnp.float32, -s_in, s_in),
        "w1": jax.random.uniform(ks[1], (c_out, c_out), jnp.float32, -s_out, s_out),
        # BatchNorm affine params (torch defaults: gamma=1, beta=0).
        "g0": jnp.ones((c_out,), jnp.float32),
        "be0": jnp.zeros((c_out,), jnp.float32),
        "g1": jnp.ones((c_out,), jnp.float32),
        "be1": jnp.zeros((c_out,), jnp.float32),
        # Conv1d(in, out, kernel_size=1) residual projection: [Cin, Cout] (= W[:, :, 0].T).
        "wl": jax.random.uniform(ks[2], (c_in, c_out), jnp.float32, -s_in, s_in),
        "bl": jax.random.uniform(ks[3], (c_out,), jnp.float32, -s_in, s_in),
    }


def resblock_reference(a_hat, x, params):
    """Pure-JAX reference mirroring the kernel's rounding (bf16 MXU inputs, f32
    accumulation / VPU math, training-mode BN with one-pass variance)."""
    eps = 1e-5
    rnd = lambda v: v.astype(jnp.bfloat16).astype(jnp.float32)
    a = rnd(a_hat)
    xq = rnd(x)
    lift = rnd(xq @ rnd(params["w0"]))
    res = xq @ rnd(params["wl"]) + params["bl"]
    h = a @ lift
    mean = jnp.mean(h, axis=0)
    var = jnp.maximum(jnp.mean(h * h, axis=0) - mean * mean, 0.0)
    scale = params["g0"] * jax.lax.rsqrt(var + eps)
    h = jnp.maximum(h * scale + (params["be0"] - mean * scale), 0.0)
    t = rnd(rnd(h) @ rnd(params["w1"]))
    h2 = a @ t
    mean = jnp.mean(h2, axis=0)
    var = jnp.maximum(jnp.mean(h2 * h2, axis=0) - mean * mean, 0.0)
    scale = params["g1"] * jax.lax.rsqrt(var + eps)
    h2 = h2 * scale + (params["be1"] - mean * scale)
    return jnp.maximum(h2 + res, 0.0)


# --------------------------------------------------------------------------- main

if __name__ == "__main__":
    key = jax.random.PRNGKey(0)
    N, C_IN, C_OUT = 64, 4, 8

    k_x, k_p = jax.random.split(key)
    x = jax.random.normal(k_x, (N, C_IN), jnp.float32)

    # Deterministic ring graph: edges i -> (i+1) % N and reverse.
    idx = jnp.arange(N)
    src = jnp.concatenate([idx, (idx + 1) % N])
    dst = jnp.concatenate([(idx + 1) % N, idx])
    edge_index = jnp.stack([src, dst], axis=0)             # [2, 2N]

    a_hat = build_normalized_adjacency(edge_index, N)
    params = init_params(k_p, C_IN, C_OUT)

    # Hoisted per-graph / per-weight prep (bf16 A_hat^T, fused transposed weights).
    prep = prepare_operands(a_hat, params)

    out = resblock_forward(prep, x)
    jax.block_until_ready(out)

    assert out.shape == (N, C_OUT)
    assert bool(jnp.all(jnp.isfinite(out)))
    ref = resblock_reference(a_hat, x, params)
    assert bool(jnp.allclose(out, ref, atol=3e-2, rtol=3e-2)), \
        float(jnp.max(jnp.abs(out - ref)))
    print("KERNEL_OK")
</pallas_src>

<mosaic_0001>
module attributes {stable_mosaic.version = 11 : i64} {
  func.func @resblock_kernel(%arg0: i32, %arg1: i32, %arg2: memref<64x64xbf16, #tpu.memory_space<vmem>>, %arg3: memref<4x64xf32, #tpu.memory_space<vmem>>, %arg4: memref<16x4xbf16, #tpu.memory_space<vmem>>, %arg5: memref<8x8xbf16, #tpu.memory_space<vmem>>, %arg6: memref<8x1xf32, #tpu.memory_space<vmem>>, %arg7: memref<8x1xf32, #tpu.memory_space<vmem>>, %arg8: memref<8x1xf32, #tpu.memory_space<vmem>>, %arg9: memref<8x1xf32, #tpu.memory_space<vmem>>, %arg10: memref<8x1xf32, #tpu.memory_space<vmem>>, %arg11: memref<8x64xf32, #tpu.memory_space<vmem>>, %arg12: memref<8x64xbf16, #tpu.memory_space<vmem>>, %arg13: memref<8x64xbf16, #tpu.memory_space<vmem>>, %arg14: memref<8x64xf32, #tpu.memory_space<vmem>>, %arg15: memref<1x8x64xf32, #tpu.memory_space<vmem>>, %arg16: memref<1x8x64xf32, #tpu.memory_space<vmem>>, %arg17: memref<8x1xf32, #tpu.memory_space<vmem>>, %arg18: memref<8x1xf32, #tpu.memory_space<vmem>>) attributes {dimension_semantics = [#tpu.dimension_semantics<arbitrary>, #tpu.dimension_semantics<arbitrary>], iteration_bounds = array<i64: 2, 1>, scalar_prefetch = 0 : i64, scratch_operands = 7 : i64, tpu.core_type = #tpu.core_type<tc>, window_params = [{transform_indices = @transform_0, window_bounds = array<i64: 64, 64>}, {pipeline_mode = #tpu.pipeline_mode<synchronous>, transform_indices = @transform_1, window_bounds = array<i64: 4, 64>}, {pipeline_mode = #tpu.pipeline_mode<synchronous>, transform_indices = @transform_2, window_bounds = array<i64: 16, 4>}, {pipeline_mode = #tpu.pipeline_mode<synchronous>, transform_indices = @transform_3, window_bounds = array<i64: 8, 8>}, {pipeline_mode = #tpu.pipeline_mode<synchronous>, transform_indices = @transform_4, window_bounds = array<i64: 8, 1>}, {pipeline_mode = #tpu.pipeline_mode<synchronous>, transform_indices = @transform_5, window_bounds = array<i64: 8, 1>}, {pipeline_mode = #tpu.pipeline_mode<synchronous>, transform_indices = @transform_6, window_bounds = array<i64: 8, 1>}, {pipeline_mode = #tpu.pipeline_mode<synchronous>, transform_indices = @transform_7, window_bounds = array<i64: 8, 1>}, {pipeline_mode = #tpu.pipeline_mode<synchronous>, transform_indices = @transform_8, window_bounds = array<i64: 8, 1>}, {pipeline_mode = #tpu.pipeline_mode<synchronous>, transform_indices = @transform_9, window_bounds = array<i64: 8, 64>}]} {
    %c0_i32 = arith.constant 0 : i32
    %0 = arith.cmpi eq, %arg0, %c0_i32 : i32
    %c0_i32_0 = arith.constant 0 : i32
    %1 = arith.cmpi eq, %arg1, %c0_i32_0 : i32
    %2 = arith.andi %0, %1 : i1
    %3 = arith.extui %2 : i1 to i32
    %c0_i32_1 = arith.constant 0 : i32
    %4 = arith.cmpi ne, %3, %c0_i32_1 : i32
    scf.if %4 {
      %c0 = arith.constant 0 : index
      %c0_11 = arith.constant 0 : index
      %21 = vector.load %arg4[%c0, %c0_11] : memref<16x4xbf16, #tpu.memory_space<vmem>>, vector<16x4xbf16>
      %c0_12 = arith.constant 0 : index
      %c0_13 = arith.constant 0 : index
      %22 = vector.load %arg3[%c0_12, %c0_13] : memref<4x64xf32, #tpu.memory_space<vmem>>, vector<4x64xf32>
      %23 = arith.truncf %22 : vector<4x64xf32> to vector<4x64xbf16>
      %cst = arith.constant dense<0.000000e+00> : vector<16x64xf32>
      %24 = tpu.matmul %21, %23, %cst {dimension_numbers = #tpu.dot_dimension_numbers<[1], [0], [0], [1], [0, 0, 1, 1], [], []>} : vector<16x4xbf16>, vector<4x64xbf16>, vector<16x64xf32> -> vector<16x64xf32>
      %25 = vector.extract_strided_slice %24 {offsets = [0, 0], sizes = [8, 64], strides = [1, 1]} : vector<16x64xf32> to vector<8x64xf32>
      %26 = arith.truncf %25 : vector<8x64xf32> to vector<8x64xbf16>
      %c0_14 = arith.constant 0 : index
      %c0_15 = arith.constant 0 : index
      %27 = vector.load %arg12[%c0_14, %c0_15] : memref<8x64xbf16, #tpu.memory_space<vmem>>, vector<8x64xbf16>
      tpu.vector_store %arg12[%c0_14, %c0_15], %26 {strides = array<i32>} : memref<8x64xbf16, #tpu.memory_space<vmem>>, vector<8x64xbf16>,
      %28 = vector.extract_strided_slice %24 {offsets = [8, 0], sizes = [8, 64], strides = [1, 1]} : vector<16x64xf32> to vector<8x64xf32>
      %c0_16 = arith.constant 0 : index
      %c0_17 = arith.constant 0 : index
      %29 = vector.load %arg10[%c0_16, %c0_17] : memref<8x1xf32, #tpu.memory_space<vmem>>, vector<8x1xf32>
      %30 = vector.broadcast %29 : vector<8x1xf32> to vector<8x64xf32>
      %31 = arith.addf %28, %30 : vector<8x64xf32>
      %c0_18 = arith.constant 0 : index
      %c0_19 = arith.constant 0 : index
      %32 = vector.load %arg14[%c0_18, %c0_19] : memref<8x64xf32, #tpu.memory_space<vmem>>, vector<8x64xf32>
      tpu.vector_store %arg14[%c0_18, %c0_19], %31 {strides = array<i32>} : memref<8x64xf32, #tpu.memory_space<vmem>>, vector<8x64xf32>,
      %cst_20 = arith.constant 0.000000e+00 : f32
      %33 = vector.broadcast %cst_20 : f32 to vector<8x1xf32>
      %c0_21 = arith.constant 0 : index
      %c0_22 = arith.constant 0 : index
      %34 = vector.load %arg17[%c0_21, %c0_22] : memref<8x1xf32, #tpu.memory_space<vmem>>, vector<8x1xf32>
      tpu.vector_store %arg17[%c0_21, %c0_22], %33 {strides = array<i32>} : memref<8x1xf32, #tpu.memory_space<vmem>>, vector<8x1xf32>,
      %cst_23 = arith.constant 0.000000e+00 : f32
      %35 = vector.broadcast %cst_23 : f32 to vector<8x1xf32>
      %c0_24 = arith.constant 0 : index
      %c0_25 = arith.constant 0 : index
      %36 = vector.load %arg18[%c0_24, %c0_25] : memref<8x1xf32, #tpu.memory_space<vmem>>, vector<8x1xf32>
      tpu.vector_store %arg18[%c0_24, %c0_25], %35 {strides = array<i32>} : memref<8x1xf32, #tpu.memory_space<vmem>>, vector<8x1xf32>,
    } else {
    }
    %c0_i32_2 = arith.constant 0 : i32
    %5 = arith.cmpi eq, %arg0, %c0_i32_2 : i32
    %6 = arith.extui %5 : i1 to i32
    %c0_i32_3 = arith.constant 0 : i32
    %7 = arith.cmpi ne, %6, %c0_i32_3 : i32
    scf.if %7 {
      %c0 = arith.constant 0 : index
      %c0_11 = arith.constant 0 : index
      %21 = vector.load %arg12[%c0, %c0_11] : memref<8x64xbf16, #tpu.memory_space<vmem>>, vector<8x64xbf16>
      %c0_12 = arith.constant 0 : index
      %c0_13 = arith.constant 0 : index
      %22 = vector.load %arg2[%c0_12, %c0_13] : memref<64x64xbf16, #tpu.memory_space<vmem>>, vector<64x64xbf16>
      %cst = arith.constant dense<0.000000e+00> : vector<8x64xf32>
      %23 = tpu.matmul %21, %22, %cst {dimension_numbers = #tpu.dot_dimension_numbers<[1], [0], [0], [1], [0, 0, 1, 1], [], []>} : vector<8x64xbf16>, vector<64x64xbf16>, vector<8x64xf32> -> vector<8x64xf32>
      %24 = arith.index_cast %arg1 : i32 to index
      %c0_14 = arith.constant 0 : index
      %c0_15 = arith.constant 0 : index
      %25 = vector.load %arg15[%24, %c0_14, %c0_15] : memref<1x8x64xf32, #tpu.memory_space<vmem>>, vector<1x8x64xf32>
      %26 = vector.shape_cast %25 : vector<1x8x64xf32> to vector<8x64xf32>
      %27 = vector.shape_cast %23 : vector<8x64xf32> to vector<1x8x64xf32>
      tpu.vector_store %arg15[%24, %c0_14, %c0_15], %27 {strides = array<i32>} : memref<1x8x64xf32, #tpu.memory_space<vmem>>, vector<1x8x64xf32>,
      %c0_16 = arith.constant 0 : index
      %c0_17 = arith.constant 0 : index
      %28 = vector.load %arg17[%c0_16, %c0_17] : memref<8x1xf32, #tpu.memory_space<vmem>>, vector<8x1xf32>
      %cst_18 = arith.constant dense<0.000000e+00> : vector<8xf32>
      %29 = vector.multi_reduction <add>, %23, %cst_18 [1] : vector<8x64xf32> to vector<8xf32>
      %30 = vector.shape_cast %29 : vector<8xf32> to vector<8x1xf32>
      %31 = arith.addf %28, %30 : vector<8x1xf32>
      %c0_19 = arith.constant 0 : index
      %c0_20 = arith.constant 0 : index
      %32 = vector.load %arg17[%c0_19, %c0_20] : memref<8x1xf32, #tpu.memory_space<vmem>>, vector<8x1xf32>
      tpu.vector_store %arg17[%c0_19, %c0_20], %31 {strides = array<i32>} : memref<8x1xf32, #tpu.memory_space<vmem>>, vector<8x1xf32>,
      %c0_21 = arith.constant 0 : index
      %c0_22 = arith.constant 0 : index
      %33 = vector.load %arg18[%c0_21, %c0_22] : memref<8x1xf32, #tpu.memory_space<vmem>>, vector<8x1xf32>
      %34 = arith.mulf %23, %23 : vector<8x64xf32>
      %cst_23 = arith.constant dense<0.000000e+00> : vector<8xf32>
      %35 = vector.multi_reduction <add>, %34, %cst_23 [1] : vector<8x64xf32> to vector<8xf32>
      %36 = vector.shape_cast %35 : vector<8xf32> to vector<8x1xf32>
      %37 = arith.addf %33, %36 : vector<8x1xf32>
      %c0_24 = arith.constant 0 : index
      %c0_25 = arith.constant 0 : index
      %38 = vector.load %arg18[%c0_24, %c0_25] : memref<8x1xf32, #tpu.memory_space<vmem>>, vector<8x1xf32>
      tpu.vector_store %arg18[%c0_24, %c0_25], %37 {strides = array<i32>} : memref<8x1xf32, #tpu.memory_space<vmem>>, vector<8x1xf32>,
    } else {
    }
    %c1_i32 = arith.constant 1 : i32
    %8 = arith.cmpi eq, %arg0, %c1_i32 : i32
    %c0_i32_4 = arith.constant 0 : i32
    %9 = arith.cmpi eq, %arg1, %c0_i32_4 : i32
    %10 = arith.andi %8, %9 : i1
    %11 = arith.extui %10 : i1 to i32
    %c0_i32_5 = arith.constant 0 : i32
    %12 = arith.cmpi ne, %11, %c0_i32_5 : i32
    scf.if %12 {
      %c0 = arith.constant 0 : index
      %c0_11 = arith.constant 0 : index
      %21 = vector.load %arg17[%c0, %c0_11] : memref<8x1xf32, #tpu.memory_space<vmem>>, vector<8x1xf32>
      %cst = arith.constant 1.562500e-02 : f32
      %22 = vector.broadcast %cst : f32 to vector<8x1xf32>
      %23 = arith.mulf %21, %22 : vector<8x1xf32>
      %c0_12 = arith.constant 0 : index
      %c0_13 = arith.constant 0 : index
      %24 = vector.load %arg18[%c0_12, %c0_13] : memref<8x1xf32, #tpu.memory_space<vmem>>, vector<8x1xf32>
      %cst_14 = arith.constant 1.562500e-02 : f32
      %25 = vector.broadcast %cst_14 : f32 to vector<8x1xf32>
      %26 = arith.mulf %24, %25 : vector<8x1xf32>
      %27 = arith.mulf %23, %23 : vector<8x1xf32>
      %28 = arith.subf %26, %27 : vector<8x1xf32>
      %cst_15 = arith.constant 0.000000e+00 : f32
      %29 = vector.broadcast %cst_15 : f32 to vector<8x1xf32>
      %30 = arith.maximumf %28, %29 : vector<8x1xf32>
      %c0_16 = arith.constant 0 : index
      %c0_17 = arith.constant 0 : index
      %31 = vector.load %arg6[%c0_16, %c0_17] : memref<8x1xf32, #tpu.memory_space<vmem>>, vector<8x1xf32>
      %cst_18 = arith.constant 9.99999974E-6 : f32
      %32 = vector.broadcast %cst_18 : f32 to vector<8x1xf32>
      %33 = arith.addf %30, %32 : vector<8x1xf32>
      %34 = math.rsqrt %33 : vector<8x1xf32>
      %35 = arith.mulf %31, %34 : vector<8x1xf32>
      %c0_19 = arith.constant 0 : index
      %c0_20 = arith.constant 0 : index
      %36 = vector.load %arg7[%c0_19, %c0_20] : memref<8x1xf32, #tpu.memory_space<vmem>>, vector<8x1xf32>
      %37 = arith.mulf %23, %35 : vector<8x1xf32>
      %38 = arith.subf %36, %37 : vector<8x1xf32>
      %c0_21 = arith.constant 0 : index
      %c0_22 = arith.constant 0 : index
      %c0_23 = arith.constant 0 : index
      %39 = vector.load %arg15[%c0_21, %c0_22, %c0_23] : memref<1x8x64xf32, #tpu.memory_space<vmem>>, vector<1x8x64xf32>
      %40 = vector.shape_cast %39 : vector<1x8x64xf32> to vector<8x64xf32>
      %41 = vector.broadcast %35 : vector<8x1xf32> to vector<8x64xf32>
      %42 = arith.mulf %40, %41 : vector<8x64xf32>
      %43 = vector.broadcast %38 : vector<8x1xf32> to vector<8x64xf32>
      %44 = arith.addf %42, %43 : vector<8x64xf32>
      %cst_24 = arith.constant 0.000000e+00 : f32
      %45 = vector.broadcast %cst_24 : f32 to vector<8x64xf32>
      %46 = arith.maximumf %44, %45 : vector<8x64xf32>
      %47 = arith.truncf %46 : vector<8x64xf32> to vector<8x64xbf16>
      %c0_25 = arith.constant 0 : index
      %c0_26 = arith.constant 0 : index
      %48 = vector.load %arg5[%c0_25, %c0_26] : memref<8x8xbf16, #tpu.memory_space<vmem>>, vector<8x8xbf16>
      %cst_27 = arith.constant dense<0.000000e+00> : vector<8x64xf32>
      %49 = tpu.matmul %48, %47, %cst_27 {dimension_numbers = #tpu.dot_dimension_numbers<[1], [0], [0], [1], [0, 0, 1, 1], [], []>} : vector<8x8xbf16>, vector<8x64xbf16>, vector<8x64xf32> -> vector<8x64xf32>
      %50 = arith.truncf %49 : vector<8x64xf32> to vector<8x64xbf16>
      %c0_28 = arith.constant 0 : index
      %c0_29 = arith.constant 0 : index
      %51 = vector.load %arg13[%c0_28, %c0_29] : memref<8x64xbf16, #tpu.memory_space<vmem>>, vector<8x64xbf16>
      tpu.vector_store %arg13[%c0_28, %c0_29], %50 {strides = array<i32>} : memref<8x64xbf16, #tpu.memory_space<vmem>>, vector<8x64xbf16>,
      %cst_30 = arith.constant 0.000000e+00 : f32
      %52 = vector.broadcast %cst_30 : f32 to vector<8x1xf32>
      %c0_31 = arith.constant 0 : index
      %c0_32 = arith.constant 0 : index
      %53 = vector.load %arg17[%c0_31, %c0_32] : memref<8x1xf32, #tpu.memory_space<vmem>>, vector<8x1xf32>
      tpu.vector_store %arg17[%c0_31, %c0_32], %52 {strides = array<i32>} : memref<8x1xf32, #tpu.memory_space<vmem>>, vector<8x1xf32>,
      %cst_33 = arith.constant 0.000000e+00 : f32
      %54 = vector.broadcast %cst_33 : f32 to vector<8x1xf32>
      %c0_34 = arith.constant 0 : index
      %c0_35 = arith.constant 0 : index
      %55 = vector.load %arg18[%c0_34, %c0_35] : memref<8x1xf32, #tpu.memory_space<vmem>>, vector<8x1xf32>
      tpu.vector_store %arg18[%c0_34, %c0_35], %54 {strides = array<i32>} : memref<8x1xf32, #tpu.memory_space<vmem>>, vector<8x1xf32>,
    } else {
    }
    %c1_i32_6 = arith.constant 1 : i32
    %13 = arith.cmpi eq, %arg0, %c1_i32_6 : i32
    %14 = arith.extui %13 : i1 to i32
    %c0_i32_7 = arith.constant 0 : i32
    %15 = arith.cmpi ne, %14, %c0_i32_7 : i32
    scf.if %15 {
      %c0 = arith.constant 0 : index
      %c0_11 = arith.constant 0 : index
      %21 = vector.load %arg13[%c0, %c0_11] : memref<8x64xbf16, #tpu.memory_space<vmem>>, vector<8x64xbf16>
      %c0_12 = arith.constant 0 : index
      %c0_13 = arith.constant 0 : index
      %22 = vector.load %arg2[%c0_12, %c0_13] : memref<64x64xbf16, #tpu.memory_space<vmem>>, vector<64x64xbf16>
      %cst = arith.constant dense<0.000000e+00> : vector<8x64xf32>
      %23 = tpu.matmul %21, %22, %cst {dimension_numbers = #tpu.dot_dimension_numbers<[1], [0], [0], [1], [0, 0, 1, 1], [], []>} : vector<8x64xbf16>, vector<64x64xbf16>, vector<8x64xf32> -> vector<8x64xf32>
      %24 = arith.index_cast %arg1 : i32 to index
      %c0_14 = arith.constant 0 : index
      %c0_15 = arith.constant 0 : index
      %25 = vector.load %arg16[%24, %c0_14, %c0_15] : memref<1x8x64xf32, #tpu.memory_space<vmem>>, vector<1x8x64xf32>
      %26 = vector.shape_cast %25 : vector<1x8x64xf32> to vector<8x64xf32>
      %27 = vector.shape_cast %23 : vector<8x64xf32> to vector<1x8x64xf32>
      tpu.vector_store %arg16[%24, %c0_14, %c0_15], %27 {strides = array<i32>} : memref<1x8x64xf32, #tpu.memory_space<vmem>>, vector<1x8x64xf32>,
      %c0_16 = arith.constant 0 : index
      %c0_17 = arith.constant 0 : index
      %28 = vector.load %arg17[%c0_16, %c0_17] : memref<8x1xf32, #tpu.memory_space<vmem>>, vector<8x1xf32>
      %cst_18 = arith.constant dense<0.000000e+00> : vector<8xf32>
      %29 = vector.multi_reduction <add>, %23, %cst_18 [1] : vector<8x64xf32> to vector<8xf32>
      %30 = vector.shape_cast %29 : vector<8xf32> to vector<8x1xf32>
      %31 = arith.addf %28, %30 : vector<8x1xf32>
      %c0_19 = arith.constant 0 : index
      %c0_20 = arith.constant 0 : index
      %32 = vector.load %arg17[%c0_19, %c0_20] : memref<8x1xf32, #tpu.memory_space<vmem>>, vector<8x1xf32>
      tpu.vector_store %arg17[%c0_19, %c0_20], %31 {strides = array<i32>} : memref<8x1xf32, #tpu.memory_space<vmem>>, vector<8x1xf32>,
      %c0_21 = arith.constant 0 : index
      %c0_22 = arith.constant 0 : index
      %33 = vector.load %arg18[%c0_21, %c0_22] : memref<8x1xf32, #tpu.memory_space<vmem>>, vector<8x1xf32>
      %34 = arith.mulf %23, %23 : vector<8x64xf32>
      %cst_23 = arith.constant dense<0.000000e+00> : vector<8xf32>
      %35 = vector.multi_reduction <add>, %34, %cst_23 [1] : vector<8x64xf32> to vector<8xf32>
      %36 = vector.shape_cast %35 : vector<8xf32> to vector<8x1xf32>
      %37 = arith.addf %33, %36 : vector<8x1xf32>
      %c0_24 = arith.constant 0 : index
      %c0_25 = arith.constant 0 : index
      %38 = vector.load %arg18[%c0_24, %c0_25] : memref<8x1xf32, #tpu.memory_space<vmem>>, vector<8x1xf32>
      tpu.vector_store %arg18[%c0_24, %c0_25], %37 {strides = array<i32>} : memref<8x1xf32, #tpu.memory_space<vmem>>, vector<8x1xf32>,
    } else {
    }
    %c1_i32_8 = arith.constant 1 : i32
    %16 = arith.cmpi eq, %arg0, %c1_i32_8 : i32
    %c0_i32_9 = arith.constant 0 : i32
    %17 = arith.cmpi eq, %arg1, %c0_i32_9 : i32
    %18 = arith.andi %16, %17 : i1
    %19 = arith.extui %18 : i1 to i32
    %c0_i32_10 = arith.constant 0 : i32
    %20 = arith.cmpi ne, %19, %c0_i32_10 : i32
    scf.if %20 {
      %c0 = arith.constant 0 : index
      %c0_11 = arith.constant 0 : index
      %21 = vector.load %arg17[%c0, %c0_11] : memref<8x1xf32, #tpu.memory_space<vmem>>, vector<8x1xf32>
      %cst = arith.constant 1.562500e-02 : f32
      %22 = vector.broadcast %cst : f32 to vector<8x1xf32>
      %23 = arith.mulf %21, %22 : vector<8x1xf32>
      %c0_12 = arith.constant 0 : index
      %c0_13 = arith.constant 0 : index
      %24 = vector.load %arg18[%c0_12, %c0_13] : memref<8x1xf32, #tpu.memory_space<vmem>>, vector<8x1xf32>
      %cst_14 = arith.constant 1.562500e-02 : f32
      %25 = vector.broadcast %cst_14 : f32 to vector<8x1xf32>
      %26 = arith.mulf %24, %25 : vector<8x1xf32>
      %27 = arith.mulf %23, %23 : vector<8x1xf32>
      %28 = arith.subf %26, %27 : vector<8x1xf32>
      %cst_15 = arith.constant 0.000000e+00 : f32
      %29 = vector.broadcast %cst_15 : f32 to vector<8x1xf32>
      %30 = arith.maximumf %28, %29 : vector<8x1xf32>
      %c0_16 = arith.constant 0 : index
      %c0_17 = arith.constant 0 : index
      %31 = vector.load %arg8[%c0_16, %c0_17] : memref<8x1xf32, #tpu.memory_space<vmem>>, vector<8x1xf32>
      %cst_18 = arith.constant 9.99999974E-6 : f32
      %32 = vector.broadcast %cst_18 : f32 to vector<8x1xf32>
      %33 = arith.addf %30, %32 : vector<8x1xf32>
      %34 = math.rsqrt %33 : vector<8x1xf32>
      %35 = arith.mulf %31, %34 : vector<8x1xf32>
      %c0_19 = arith.constant 0 : index
      %c0_20 = arith.constant 0 : index
      %36 = vector.load %arg9[%c0_19, %c0_20] : memref<8x1xf32, #tpu.memory_space<vmem>>, vector<8x1xf32>
      %37 = arith.mulf %23, %35 : vector<8x1xf32>
      %38 = arith.subf %36, %37 : vector<8x1xf32>
      %c0_21 = arith.constant 0 : index
      %c0_22 = arith.constant 0 : index
      %c0_23 = arith.constant 0 : index
      %39 = vector.load %arg16[%c0_21, %c0_22, %c0_23] : memref<1x8x64xf32, #tpu.memory_space<vmem>>, vector<1x8x64xf32>
      %40 = vector.shape_cast %39 : vector<1x8x64xf32> to vector<8x64xf32>
      %41 = vector.broadcast %35 : vector<8x1xf32> to vector<8x64xf32>
      %42 = arith.mulf %40, %41 : vector<8x64xf32>
      %43 = vector.broadcast %38 : vector<8x1xf32> to vector<8x64xf32>
      %44 = arith.addf %42, %43 : vector<8x64xf32>
      %c0_24 = arith.constant 0 : index
      %c0_25 = arith.constant 0 : index
      %45 = vector.load %arg14[%c0_24, %c0_25] : memref<8x64xf32, #tpu.memory_space<vmem>>, vector<8x64xf32>
      %46 = arith.addf %44, %45 : vector<8x64xf32>
      %cst_26 = arith.constant 0.000000e+00 : f32
      %47 = vector.broadcast %cst_26 : f32 to vector<8x64xf32>
      %48 = arith.maximumf %46, %47 : vector<8x64xf32>
      %c0_27 = arith.constant 0 : index
      %c0_28 = arith.constant 0 : index
      %49 = vector.load %arg11[%c0_27, %c0_28] : memref<8x64xf32, #tpu.memory_space<vmem>>, vector<8x64xf32>
      tpu.vector_store %arg11[%c0_27, %c0_28], %48 {strides = array<i32>} : memref<8x64xf32, #tpu.memory_space<vmem>>, vector<8x64xf32>,
    } else {
    }
    return
  }
  func.func @transform_0(%arg0: i32, %arg1: i32) -> (i32, i32) {
    %c0_i32 = arith.constant 0 : i32
    %c0_i32_0 = arith.constant 0 : i32
    return %c0_i32, %arg1 : i32, i32
  }
  func.func @transform_1(%arg0: i32, %arg1: i32) -> (i32, i32) {
    %c0_i32 = arith.constant 0 : i32
    %c0_i32_0 = arith.constant 0 : i32
    %c0_i32_1 = arith.constant 0 : i32
    return %c0_i32, %c0_i32_0 : i32, i32
  }
  func.func @transform_2(%arg0: i32, %arg1: i32) -> (i32, i32) {
    %c0_i32 = arith.constant 0 : i32
    %c0_i32_0 = arith.constant 0 : i32
    %c0_i32_1 = arith.constant 0 : i32
    return %c0_i32, %c0_i32_0 : i32, i32
  }
  func.func @transform_3(%arg0: i32, %arg1: i32) -> (i32, i32) {
    %c0_i32 = arith.constant 0 : i32
    %c0_i32_0 = arith.constant 0 : i32
    %c0_i32_1 = arith.constant 0 : i32
    return %c0_i32, %c0_i32_0 : i32, i32
  }
  func.func @transform_4(%arg0: i32, %arg1: i32) -> (i32, i32) {
    %c0_i32 = arith.constant 0 : i32
    %c0_i32_0 = arith.constant 0 : i32
    %c0_i32_1 = arith.constant 0 : i32
    return %c0_i32, %c0_i32_0 : i32, i32
  }
  func.func @transform_5(%arg0: i32, %arg1: i32) -> (i32, i32) {
    %c0_i32 = arith.constant 0 : i32
    %c0_i32_0 = arith.constant 0 : i32
    %c0_i32_1 = arith.constant 0 : i32
    return %c0_i32, %c0_i32_0 : i32, i32
  }
  func.func @transform_6(%arg0: i32, %arg1: i32) -> (i32, i32) {
    %c0_i32 = arith.constant 0 : i32
    %c0_i32_0 = arith.constant 0 : i32
    %c0_i32_1 = arith.constant 0 : i32
    return %c0_i32, %c0_i32_0 : i32, i32
  }
  func.func @transform_7(%arg0: i32, %arg1: i32) -> (i32, i32) {
    %c0_i32 = arith.constant 0 : i32
    %c0_i32_0 = arith.constant 0 : i32
    %c0_i32_1 = arith.constant 0 : i32
    return %c0_i32, %c0_i32_0 : i32, i32
  }
  func.func @transform_8(%arg0: i32, %arg1: i32) -> (i32, i32) {
    %c0_i32 = arith.constant 0 : i32
    %c0_i32_0 = arith.constant 0 : i32
    %c0_i32_1 = arith.constant 0 : i32
    return %c0_i32, %c0_i32_0 : i32, i32
  }
  func.func @transform_9(%arg0: i32, %arg1: i32) -> (i32, i32) {
    %c0_i32 = arith.constant 0 : i32
    %c0_i32_0 = arith.constant 0 : i32
    %c0_i32_1 = arith.constant 0 : i32
    return %c0_i32, %c0_i32_0 : i32, i32
  }
}

</mosaic_0001>

<llo_original>
// kernel: tpu_custom_call.1
$region0: #{tpu_custom_call.1}
  #allocation0 [shape = 'u32[]', space=smem, size = 0x4, offset = 0x4, fixed_abs, tag = 'smem constant byte address 0x4 - core index']
  #allocation1 [shape = 'u32[144,128]{1,0:T(1,128)}', space=vmem, size = 0x12000, scoped, tag = 'internal scratch']
  #allocation2 [shape = 'bf16[8,64]{1,0:T(8,128)(2,1)}', space=vmem, size = 0x800, scoped, tag = 'scratch operand']
  #allocation3 [shape = 'bf16[8,64]{1,0:T(8,128)(2,1)}', space=vmem, size = 0x800, scoped, tag = 'scratch operand']
  #allocation4 [shape = 'f32[8,64]{1,0:T(8,128)}', space=vmem, size = 0x1000, scoped, tag = 'scratch operand']
  #allocation5 [shape = 'f32[1,8,64]{2,1,0:T(8,128)}', space=vmem, size = 0x1000, scoped, tag = 'scratch operand']
  #allocation6 [shape = 'f32[1,8,64]{2,1,0:T(8,128)}', space=vmem, size = 0x1000, scoped, tag = 'scratch operand']
  #allocation7 [shape = 'f32[8,1]{1,0:T(8,128)}', space=vmem, size = 0x1000, scoped, tag = 'scratch operand']
  #allocation8 [shape = 'f32[8,1]{1,0:T(8,128)}', space=vmem, size = 0x1000, scoped, tag = 'scratch operand']
  %s0 = inlined_call_operand.vmem [shape: bf16[64,64], index: 0, kind: input, shape index: {}]
  %s1 = inlined_call_operand.vmem [shape: f32[4,64], index: 1, kind: input, shape index: {}]
  %s2 = inlined_call_operand.vmem [shape: bf16[16,4], index: 2, kind: input, shape index: {}]
  %s3 = inlined_call_operand.vmem [shape: bf16[8,8], index: 3, kind: input, shape index: {}]
  %s4 = inlined_call_operand.vmem [shape: f32[8,1], index: 4, kind: input, shape index: {}]
  %s5 = inlined_call_operand.vmem [shape: f32[8,1], index: 5, kind: input, shape index: {}]
  %s6 = inlined_call_operand.vmem [shape: f32[8,1], index: 6, kind: input, shape index: {}]
  %s7 = inlined_call_operand.vmem [shape: f32[8,1], index: 7, kind: input, shape index: {}]
  %s8 = inlined_call_operand.vmem [shape: f32[8,1], index: 8, kind: input, shape index: {}]
  %s9 = inlined_call_operand.hbm [shape: f32[8,64], index: 9, kind: output, shape index: {}]
  %s10 = sld [smem:[#allocation0]]
  $region89: #{tpu_custom_call.1} parent=0
    _
  %s12 = ssub.s32 1, %s10
  %s13 = scalar_select 0, %s12, %s10
  $region1: #{tpu_custom_call.1} parent=0
    #allocation9 [shape = 'u8[4096]{0}', space=vmem, size = 0x1000, scoped, tag = 'output window, operand 0, single buffered']
    #allocation10 [shape = 's32[2]{0}', space=sflag, size = 0x8, scoped, tag = 'scoped memory for tpu_custom_call.1']
    %14 = vsyncpa [#allocation10], 0
    loop: start=0, step=1, limit=4
    $region2: #{tpu_custom_call.1} parent=1 // loop_pre_header
      _
    $region3: #{tpu_custom_call.1} parent=1 // loop_header
      %s16 = sphi 0, %s20
      %p17 = scmp.ge.s32.totalorder %s16, 4
      %s23 = sphi 0, %s35
      %s24 = sphi 0, %s31
      %s25 = sphi 0, %s23
      %s26 = sphi 0, %s24
      %s27 = sphi 0, %s25
      %s28 = sphi 0, %s26
      %s38 = sphi 0, %s40
      %s41 = sphi 0, %s38
      %s42 = sphi 0, %s41
      %s58 = sphi 0, %s42
      %s62 = sphi 0, %s62
      %s64 = sphi 0, %s62
      %s65 = sphi 0, %s64
      %s79 = sphi 0, %s65
      %s83 = sphi 0, %s83
      %s85 = sphi 0, %s83
      %s86 = sphi 0, %s85
      %s100 = sphi 0, %s86
      %s104 = sphi 0, %s104
      %s106 = sphi 0, %s104
      %s107 = sphi 0, %s106
      %s121 = sphi 0, %s107
      %s125 = sphi 0, %s125
      %s127 = sphi 0, %s125
      %s128 = sphi 0, %s127
      %s142 = sphi 0, %s128
      %s146 = sphi 0, %s146
      %s148 = sphi 0, %s146
      %s149 = sphi 0, %s148
      %s163 = sphi 0, %s149
      %s167 = sphi 0, %s167
      %s169 = sphi 0, %s167
      %s170 = sphi 0, %s169
      %s184 = sphi 0, %s170
      %s188 = sphi 0, %s188
      %s190 = sphi 0, %s188
      %s191 = sphi 0, %s190
      %s205 = sphi 0, %s191
      %s209 = sphi 0, %s209
      %s211 = sphi 0, %s209
      %s212 = sphi 0, %s211
      %s226 = sphi 0, %s212
      %s230 = sphi 0, %s230
      %s232 = sphi 0, %s230
      %s233 = sphi 0, %s232
      %s247 = sphi 0, %s233
    $region4: #{tpu_custom_call.1} parent=1 // loop_header_branch
      %19 = sbr.rel (%p17) target = $region8
    $region5: #{tpu_custom_call.1} parent=1 // loop_body
      %s21 = ssub.s32 %s16, 1
      %s22 = ssub.s32 %s16, 2
      %s29 = sadd.s32 1, %s24
      %p30 = scmp.ge.s32.totalorder %s29, 1
      %s31 = scalar_select %p30, 0, %s29
      %s32 = sadd.s32 1, %s23
      %s33 = scalar_select %p30, %s32, %s23
      %p34 = scmp.ge.s32.totalorder %s33, 2
      %s35 = scalar_select %p34, 0, %s33
      %s36 = ssub.s32 %s24, %s31
      %p37 = scmp.eq.s32.totalorder %s36, 0
      %s39 = sadd.s32 %s38, 1
      %s40 = scalar_select %p37, %s38, %s39
      %p43 = pneg %p37
      %p44 = scmp.eq.s32.totalorder %s16, 1
      %p45 = por %p43, %p44
      %p46 = scmp.ne.s32.totalorder %s38, %s41
      %p47 = scmp.eq.s32.totalorder %s16, 0
      %p48 = por %p46, %p47
      %p49 = scmp.ne.s32.totalorder %s38, %s41
      %p50 = scmp.eq.s32.totalorder %s21, 1
      %p51 = por %p49, %p50
      %p52 = scmp.ne.s32.totalorder %s41, %s42
      %p53 = scmp.eq.s32.totalorder %s21, 0
      %p54 = por %p52, %p53
      %p55 = scmp.ne.s32.totalorder %s41, %s42
      %p56 = scmp.eq.s32.totalorder %s22, 1
      %p57 = por %p55, %p56
      %p59 = scmp.ne.s32.totalorder %s42, %s58
      %p60 = scmp.eq.s32.totalorder %s22, 0
      %p61 = por %p59, %p60
      %s63 = sadd.s32 %s62, 1
      %p66 = scmp.eq.s32.totalorder %s16, 1
      %p67 = scmp.ne.s32.totalorder %s62, %s64
      %p68 = scmp.eq.s32.totalorder %s16, 0
      %p69 = por %p67, %p68
      %p70 = scmp.ne.s32.totalorder %s62, %s64
      %p71 = scmp.eq.s32.totalorder %s21, 1
      %p72 = por %p70, %p71
      %p73 = scmp.ne.s32.totalorder %s64, %s65
      %p74 = scmp.eq.s32.totalorder %s21, 0
      %p75 = por %p73, %p74
      %p76 = scmp.ne.s32.totalorder %s64, %s65
      %p77 = scmp.eq.s32.totalorder %s22, 1
      %p78 = por %p76, %p77
      %p80 = scmp.ne.s32.totalorder %s65, %s79
      %p81 = scmp.eq.s32.totalorder %s22, 0
      %p82 = por %p80, %p81
      %s84 = sadd.s32 %s83, 1
      %p87 = scmp.eq.s32.totalorder %s16, 1
      %p88 = scmp.ne.s32.totalorder %s83, %s85
      %p89 = scmp.eq.s32.totalorder %s16, 0
      %p90 = por %p88, %p89
      %p91 = scmp.ne.s32.totalorder %s83, %s85
      %p92 = scmp.eq.s32.totalorder %s21, 1
      %p93 = por %p91, %p92
      %p94 = scmp.ne.s32.totalorder %s85, %s86
      %p95 = scmp.eq.s32.totalorder %s21, 0
      %p96 = por %p94, %p95
      %p97 = scmp.ne.s32.totalorder %s85, %s86
      %p98 = scmp.eq.s32.totalorder %s22, 1
      %p99 = por %p97, %p98
      %p101 = scmp.ne.s32.totalorder %s86, %s100
      %p102 = scmp.eq.s32.totalorder %s22, 0
      %p103 = por %p101, %p102
      %s105 = sadd.s32 %s104, 1
      %p108 = scmp.eq.s32.totalorder %s16, 1
      %p109 = scmp.ne.s32.totalorder %s104, %s106
      %p110 = scmp.eq.s32.totalorder %s16, 0
      %p111 = por %p109, %p110
      %p112 = scmp.ne.s32.totalorder %s104, %s106
      %p113 = scmp.eq.s32.totalorder %s21, 1
      %p114 = por %p112, %p113
      %p115 = scmp.ne.s32.totalorder %s106, %s107
      %p116 = scmp.eq.s32.totalorder %s21, 0
      %p117 = por %p115, %p116
      %p118 = scmp.ne.s32.totalorder %s106, %s107
      %p119 = scmp.eq.s32.totalorder %s22, 1
      %p120 = por %p118, %p119
      %p122 = scmp.ne.s32.totalorder %s107, %s121
      %p123 = scmp.eq.s32.totalorder %s22, 0
      %p124 = por %p122, %p123
      %s126 = sadd.s32 %s125, 1
      %p129 = scmp.eq.s32.totalorder %s16, 1
      %p130 = scmp.ne.s32.totalorder %s125, %s127
      %p131 = scmp.eq.s32.totalorder %s16, 0
      %p132 = por %p130, %p131
      %p133 = scmp.ne.s32.totalorder %s125, %s127
      %p134 = scmp.eq.s32.totalorder %s21, 1
      %p135 = por %p133, %p134
      %p136 = scmp.ne.s32.totalorder %s127, %s128
      %p137 = scmp.eq.s32.totalorder %s21, 0
      %p138 = por %p136, %p137
      %p139 = scmp.ne.s32.totalorder %s127, %s128
      %p140 = scmp.eq.s32.totalorder %s22, 1
      %p141 = por %p139, %p140
      %p143 = scmp.ne.s32.totalorder %s128, %s142
      %p144 = scmp.eq.s32.totalorder %s22, 0
      %p145 = por %p143, %p144
      %s147 = sadd.s32 %s146, 1
      %p150 = scmp.eq.s32.totalorder %s16, 1
      %p151 = scmp.ne.s32.totalorder %s146, %s148
      %p152 = scmp.eq.s32.totalorder %s16, 0
      %p153 = por %p151, %p152
      %p154 = scmp.ne.s32.totalorder %s146, %s148
      %p155 = scmp.eq.s32.totalorder %s21, 1
      %p156 = por %p154, %p155
      %p157 = scmp.ne.s32.totalorder %s148, %s149
      %p158 = scmp.eq.s32.totalorder %s21, 0
      %p159 = por %p157, %p158
      %p160 = scmp.ne.s32.totalorder %s148, %s149
      %p161 = scmp.eq.s32.totalorder %s22, 1
      %p162 = por %p160, %p161
      %p164 = scmp.ne.s32.totalorder %s149, %s163
      %p165 = scmp.eq.s32.totalorder %s22, 0
      %p166 = por %p164, %p165
      %s168 = sadd.s32 %s167, 1
      %p171 = scmp.eq.s32.totalorder %s16, 1
      %p172 = scmp.ne.s32.totalorder %s167, %s169
      %p173 = scmp.eq.s32.totalorder %s16, 0
      %p174 = por %p172, %p173
      %p175 = scmp.ne.s32.totalorder %s167, %s169
      %p176 = scmp.eq.s32.totalorder %s21, 1
      %p177 = por %p175, %p176
      %p178 = scmp.ne.s32.totalorder %s169, %s170
      %p179 = scmp.eq.s32.totalorder %s21, 0
      %p180 = por %p178, %p179
      %p181 = scmp.ne.s32.totalorder %s169, %s170
      %p182 = scmp.eq.s32.totalorder %s22, 1
      %p183 = por %p181, %p182
      %p185 = scmp.ne.s32.totalorder %s170, %s184
      %p186 = scmp.eq.s32.totalorder %s22, 0
      %p187 = por %p185, %p186
      %s189 = sadd.s32 %s188, 1
      %p192 = scmp.eq.s32.totalorder %s16, 1
      %p193 = scmp.ne.s32.totalorder %s188, %s190
      %p194 = scmp.eq.s32.totalorder %s16, 0
      %p195 = por %p193, %p194
      %p196 = scmp.ne.s32.totalorder %s188, %s190
      %p197 = scmp.eq.s32.totalorder %s21, 1
      %p198 = por %p196, %p197
      %p199 = scmp.ne.s32.totalorder %s190, %s191
      %p200 = scmp.eq.s32.totalorder %s21, 0
      %p201 = por %p199, %p200
      %p202 = scmp.ne.s32.totalorder %s190, %s191
      %p203 = scmp.eq.s32.totalorder %s22, 1
      %p204 = por %p202, %p203
      %p206 = scmp.ne.s32.totalorder %s191, %s205
      %p207 = scmp.eq.s32.totalorder %s22, 0
      %p208 = por %p206, %p207
      %s210 = sadd.s32 %s209, 1
      %p213 = scmp.eq.s32.totalorder %s16, 1
      %p214 = scmp.ne.s32.totalorder %s209, %s211
      %p215 = scmp.eq.s32.totalorder %s16, 0
      %p216 = por %p214, %p215
      %p217 = scmp.ne.s32.totalorder %s209, %s211
      %p218 = scmp.eq.s32.totalorder %s21, 1
      %p219 = por %p217, %p218
      %p220 = scmp.ne.s32.totalorder %s211, %s212
      %p221 = scmp.eq.s32.totalorder %s21, 0
      %p222 = por %p220, %p221
      %p223 = scmp.ne.s32.totalorder %s211, %s212
      %p224 = scmp.eq.s32.totalorder %s22, 1
      %p225 = por %p223, %p224
      %p227 = scmp.ne.s32.totalorder %s212, %s226
      %p228 = scmp.eq.s32.totalorder %s22, 0
      %p229 = por %p227, %p228
      %s231 = sadd.s32 %s230, 1
      %p234 = scmp.eq.s32.totalorder %s16, 1
      %p235 = scmp.ne.s32.totalorder %s230, %s232
      %p236 = scmp.eq.s32.totalorder %s16, 0
      %p237 = por %p235, %p236
      %p238 = scmp.ne.s32.totalorder %s230, %s232
      %p239 = scmp.eq.s32.totalorder %s21, 1
      %p240 = por %p238, %p239
      %p241 = scmp.ne.s32.totalorder %s232, %s233
      %p242 = scmp.eq.s32.totalorder %s21, 0
      %p243 = por %p241, %p242
      %p244 = scmp.ne.s32.totalorder %s232, %s233
      %p245 = scmp.eq.s32.totalorder %s22, 1
      %p246 = por %p244, %p245
      %p248 = scmp.ne.s32.totalorder %s233, %s247
      %p249 = scmp.eq.s32.totalorder %s22, 0
      %p250 = por %p248, %p249
      %p251 = scmp.le.s32.totalorder 1, %s16
      %p252 = scmp.lt.s32.totalorder %s16, 3
      %p253 = pnand %p251, %p252
      %p254 = pneg %p253
      // Predicated region
      $region9: #{tpu_custom_call.1} parent=5 // pred_check
        _
      $region10: #{tpu_custom_call.1} parent=5 // pred_check_branch
        %256 = sbr.rel (%p253) target = $region12
      $region11: #{tpu_custom_call.1} parent=5 // pred_region
        %s257 = ssub.s32 %s16, 1
        // Predicated region
        $region13: #{tpu_custom_call.1} parent=11 // pred_check
          %p258 = pneg %p54
        $region14: #{tpu_custom_call.1} parent=11 // pred_check_branch
          %260 = sbr.rel (%p258) target = $region16
        $region15: #{tpu_custom_call.1} parent=11 // pred_region
          %p261 = scmp.lt.s32.totalorder %s26, 0
          %s262 = scalar_select %p261, %s26, 0
          %s263 = smul.addr %s262, 4
          %s264 = scalar_lea.vmem %s0, %s263
        $region16: #{tpu_custom_call.1} parent=11 // pred_fallthru
          _
        // Predicated region
        $region17: #{tpu_custom_call.1} parent=11 // pred_check
          %p265 = pneg %p75
        $region18: #{tpu_custom_call.1} parent=11 // pred_check_branch
          %267 = sbr.rel (%p265) target = $region20
        $region19: #{tpu_custom_call.1} parent=11 // pred_region
          _
        $region20: #{tpu_custom_call.1} parent=11 // pred_fallthru
          _
        // Predicated region
        $region21: #{tpu_custom_call.1} parent=11 // pred_check
          %p268 = pneg %p96
        $region22: #{tpu_custom_call.1} parent=11 // pred_check_branch
          %270 = sbr.rel (%p268) target = $region24
        $region23: #{tpu_custom_call.1} parent=11 // pred_region
          _
        $region24: #{tpu_custom_call.1} parent=11 // pred_fallthru
          _
        // Predicated region
        $region25: #{tpu_custom_call.1} parent=11 // pred_check
          %p271 = pneg %p117
        $region26: #{tpu_custom_call.1} parent=11 // pred_check_branch
          %273 = sbr.rel (%p271) target = $region28
        $region27: #{tpu_custom_call.1} parent=11 // pred_region
          _
        $region28: #{tpu_custom_call.1} parent=11 // pred_fallthru
          _
        // Predicated region
        $region29: #{tpu_custom_call.1} parent=11 // pred_check
          %p274 = pneg %p138
        $region30: #{tpu_custom_call.1} parent=11 // pred_check_branch
          %276 = sbr.rel (%p274) target = $region32
        $region31: #{tpu_custom_call.1} parent=11 // pred_region
          _
        $region32: #{tpu_custom_call.1} parent=11 // pred_fallthru
          _
        // Predicated region
        $region33: #{tpu_custom_call.1} parent=11 // pred_check
          %p277 = pneg %p159
        $region34: #{tpu_custom_call.1} parent=11 // pred_check_branch
          %279 = sbr.rel (%p277) target = $region36
        $region35: #{tpu_custom_call.1} parent=11 // pred_region
          _
        $region36: #{tpu_custom_call.1} parent=11 // pred_fallthru
          _
        // Predicated region
        $region37: #{tpu_custom_call.1} parent=11 // pred_check
          %p280 = pneg %p180
        $region38: #{tpu_custom_call.1} parent=11 // pred_check_branch
          %282 = sbr.rel (%p280) target = $region40
        $region39: #{tpu_custom_call.1} parent=11 // pred_region
          _
        $region40: #{tpu_custom_call.1} parent=11 // pred_fallthru
          _
        // Predicated region
        $region41: #{tpu_custom_call.1} parent=11 // pred_check
          %p283 = pneg %p201
        $region42: #{tpu_custom_call.1} parent=11 // pred_check_branch
          %285 = sbr.rel (%p283) target = $region44
        $region43: #{tpu_custom_call.1} parent=11 // pred_region
          _
        $region44: #{tpu_custom_call.1} parent=11 // pred_fallthru
          _
        // Predicated region
        $region45: #{tpu_custom_call.1} parent=11 // pred_check
          %p286 = pneg %p222
        $region46: #{tpu_custom_call.1} parent=11 // pred_check_branch
          %288 = sbr.rel (%p286) target = $region48
        $region47: #{tpu_custom_call.1} parent=11 // pred_region
          _
        $region48: #{tpu_custom_call.1} parent=11 // pred_fallthru
          _
      $region12: #{tpu_custom_call.1} parent=5 // pred_fallthru
        _
      %p289 = scmp.lt.s32.totalorder %s16, 2
      // Predicated region
      $region49: #{tpu_custom_call.1} parent=5 // pred_check
        %p290 = pneg %p289
      $region50: #{tpu_custom_call.1} parent=5 // pred_check_branch
        %292 = sbr.rel (%p290) target = $region52
      $region51: #{tpu_custom_call.1} parent=5 // pred_region
        _
      $region52: #{tpu_custom_call.1} parent=5 // pred_fallthru
        _
      %p293 = scmp.le.s32.totalorder 1, %s16
      %p294 = scmp.lt.s32.totalorder %s16, 3
      %p295 = pnand %p293, %p294
      %p296 = pneg %p295
      // Predicated region
      $region53: #{tpu_custom_call.1} parent=5 // pred_check
        _
      $region54: #{tpu_custom_call.1} parent=5 // pred_check_branch
        %298 = sbr.rel (%p295) target = $region56
      $region55: #{tpu_custom_call.1} parent=5 // pred_region
        %s299 = ssub.s32 %s16, 1
        %p300 = scmp.lt.s32.totalorder %s26, 0
        %s301 = scalar_select %p300, %s26, 0
        %s302 = smul.addr %s301, 4
        %s303 = scalar_lea.vmem %s0, %s302
        %p304 = pneg %p54
        %p305 = pneg %p51
        %p306 = pneg %p75
        %p307 = pneg %p72
        %p308 = pneg %p96
        %p309 = pneg %p93
        %p310 = pneg %p117
        %p311 = pneg %p114
        %p312 = pneg %p138
        %p313 = pneg %p135
        %p314 = pneg %p159
        %p315 = pneg %p156
        %p316 = pneg %p180
        %p317 = pneg %p177
        %p318 = pneg %p201
        %p319 = pneg %p198
        %p320 = pneg %p222
        %p321 = pneg %p219
        %p322 = pneg %p243
        %p323 = pneg %p240
        %p324 = scmp.lt.s32.totalorder %s26, 0
        %s325 = scalar_select %p324, %s26, 0
        %s326 = smul.addr %s325, 4
        %s327 = scalar_lea.vmem %s0, %s326
        %p329 = scmp.eq.s32.totalorder %s25, 0
        %p330 = scmp.eq.s32.totalorder %s26, 0
        %p331 = pnand %p329, %p330
        %p332 = pneg %p331
        // Predicated region
        $region57: #{tpu_custom_call.1} parent=55 // pred_check
          _
        $region58: #{tpu_custom_call.1} parent=55 // pred_check_branch
          %334 = sbr.rel (%p331) target = $region60
        $region59: #{tpu_custom_call.1} parent=55 // pred_region
          %v335 = vld [vmem:[%s2] sm:$0xf]
          %v336 = vld [vmem:[%s2 + $0x4] sm:$0xf]
          %v337 = vld [vmem:[%s1] sm:$0xf]
          %v338 = vpack.c.bf16 %v337, %v337
          %v341 = vunpack.c.l.b16 %v335
          %v342 = vunpack.c.l.b16 %v336
          %v343 = vpack.c.b16 %v342, %v341
          %vm344 = vcmask 31744
          %v346 = vsel %vm344, %v343, 0
          %vm348 = vcmask 1041408
          %v350 = vsel %vm348, %v338, 0
          %352 = vmatprep.subr.bf16.mxu0 0
          %353 = vmatpush1.bf16.msra.mxu0 %v350
          %354 = vmatprep.subr.bf16.mxu0 0
          %355 = vmatpush1.bf16.msra.mxu0 0
          %356 = vmatprep.subr.bf16.mxu0 0
          %357 = vmatpush1.bf16.msra.mxu0 0
          %358 = vmatprep.subr.bf16.mxu0 0
          %359 = vmatpush1.bf16.msra.mxu0 0
          %360 = vmatprep.subr.bf16.mxu0 0
          %361 = vmatpush1.bf16.msra.mxu0 0
          %362 = vmatprep.subr.bf16.mxu0 0
          %363 = vmatpush1.bf16.msra.mxu0 0
          %364 = vmatprep.subr.bf16.mxu0 0
          %365 = vmatpush1.bf16.msra.mxu0 0
          %366 = vmatprep.subr.bf16.mxu0 0
          %367 = vmatpush1.bf16.msra.mxu0 0
          %368 = vmatprep.subr.bf16.mxu0 0
          %369 = vmatpush1.bf16.msra.mxu0 0
          %370 = vmatprep.subr.bf16.mxu0 0
          %371 = vmatpush1.bf16.msra.mxu0 0
          %372 = vmatprep.subr.bf16.mxu0 0
          %373 = vmatpush1.bf16.msra.mxu0 0
          %374 = vmatprep.subr.bf16.mxu0 0
          %375 = vmatpush1.bf16.msra.mxu0 0
          %376 = vmatprep.subr.bf16.mxu0 0
          %377 = vmatpush1.bf16.msra.mxu0 0
          %378 = vmatprep.subr.bf16.mxu0 0
          %379 = vmatpush1.bf16.msra.mxu0 0
          %380 = vmatprep.subr.bf16.mxu0 0
          %381 = vmatpush1.bf16.msra.mxu0 0
          %382 = vmatprep.subr.bf16.mxu0 0
          %383 = vmatpush1.bf16.msra.mxu0 0
          %384 = vmatprep.mubr.bf16.mxu0 0
          %385 = vmatmul.mubr.bf16.gmra.mrb[0].mxu0 %v346
          %v386 = vpop.f32.mrb[0].mxu0
          %v387 = vadd.f32 0.0, %v386
          %v388 = vpop.f32.mrb[0].mxu0
          %v389 = vpop.f32.mrb[0].mxu0
          %v390 = vadd.f32 0.0, %v389
          %v391 = vpop.f32.mrb[0].mxu0
          %392 = vdwg.mxu0
          %v393 = vpack.c.bf16 %v387, %v387
          %vm394 = vcmask 519168
          %395 = vst.msk [vmem:[#allocation2] sm:$0xf] %vm394, %v393
          %v396 = vld [vmem:[%s8] sm:$0xff]
          %398 = vset.pattern.permute.xlu0 0
          %399 = vperm.xlu0 %398, %v396
          %v400 = vpop.permute.xlu0 %399
          %v402 = vadd.f32 %v390, %v400
          %vm403 = vcmask 523264
          %404 = vst.msk [vmem:[#allocation4] sm:$0xff] %vm403, %v402
          %vm405 = vcmask 7168
          %406 = vst.msk [vmem:[#allocation7] sm:$0xff] %vm405, 0.0
          %407 = vst.msk [vmem:[#allocation8] sm:$0xff] %vm405, 0.0
        $region60: #{tpu_custom_call.1} parent=55 // pred_fallthru
          _
        // Predicated region
        $region61: #{tpu_custom_call.1} parent=55 // pred_check
          %p408 = pneg %p329
        $region62: #{tpu_custom_call.1} parent=55 // pred_check_branch
          %410 = sbr.rel (%p408) target = $region64
        $region63: #{tpu_custom_call.1} parent=55 // pred_region
          %v411 = vld [vmem:[#allocation2] sm:$0xf]
          %v412 = vld [vmem:[%s327] sm:$0xf]
          %v413 = vld [vmem:[%s327 + $0x4] sm:$0xf]
          %v414 = vld [vmem:[%s327 + $0x8] sm:$0xf]
          %v415 = vld [vmem:[%s327 + $0xc] sm:$0xf]
          %v416 = vld [vmem:[%s327 + $0x10] sm:$0xf]
          %v417 = vld [vmem:[%s327 + $0x14] sm:$0xf]
          %v418 = vld [vmem:[%s327 + $0x18] sm:$0xf]
          %v419 = vld [vmem:[%s327 + $0x1c] sm:$0xf]
          %v428 = vunpack.c.l.b16 %v412
          %v429 = vunpack.c.l.b16 %v413
          %v430 = vunpack.c.l.b16 %v414
          %v431 = vunpack.c.l.b16 %v415
          %v432 = vunpack.c.l.b16 %v416
          %v433 = vunpack.c.l.b16 %v417
          %v434 = vunpack.c.l.b16 %v418
          %v435 = vunpack.c.l.b16 %v419
          %v436 = vpack.c.b16 %v429, %v428
          %v437 = vpack.c.b16 %v431, %v430
          %v438 = vpack.c.b16 %v433, %v432
          %v439 = vpack.c.b16 %v435, %v434
          %vm444 = vcmask 523264
          %v446 = vsel %vm444, %v411, 0
          %448 = vmatprep.subr.bf16.mxu0 0
          %449 = vmatpush1.bf16.msra.mxu0 %v436
          %450 = vmatprep.subr.bf16.mxu0 0
          %451 = vmatpush1.bf16.msra.mxu0 %v437
          %452 = vmatprep.subr.bf16.mxu0 0
          %453 = vmatpush1.bf16.msra.mxu0 %v438
          %454 = vmatprep.subr.bf16.mxu0 0
          %455 = vmatpush1.bf16.msra.mxu0 %v439
          %456 = vmatprep.subr.bf16.mxu0 0
          %457 = vmatpush1.bf16.msra.mxu0 0
          %458 = vmatprep.subr.bf16.mxu0 0
          %459 = vmatpush1.bf16.msra.mxu0 0
          %460 = vmatprep.subr.bf16.mxu0 0
          %461 = vmatpush1.bf16.msra.mxu0 0
          %462 = vmatprep.subr.bf16.mxu0 0
          %463 = vmatpush1.bf16.msra.mxu0 0
          %464 = vmatprep.subr.bf16.mxu0 0
          %465 = vmatpush1.bf16.msra.mxu0 0
          %466 = vmatprep.subr.bf16.mxu0 0
          %467 = vmatpush1.bf16.msra.mxu0 0
          %468 = vmatprep.subr.bf16.mxu0 0
          %469 = vmatpush1.bf16.msra.mxu0 0
          %470 = vmatprep.subr.bf16.mxu0 0
          %471 = vmatpush1.bf16.msra.mxu0 0
          %472 = vmatprep.subr.bf16.mxu0 0
          %473 = vmatpush1.bf16.msra.mxu0 0
          %474 = vmatprep.subr.bf16.mxu0 0
          %475 = vmatpush1.bf16.msra.mxu0 0
          %476 = vmatprep.subr.bf16.mxu0 0
          %477 = vmatpush1.bf16.msra.mxu0 0
          %478 = vmatprep.subr.bf16.mxu0 0
          %479 = vmatpush1.bf16.msra.mxu0 0
          %480 = vmatprep.mubr.bf16.mxu0 0
          %481 = vmatmul.mubr.bf16.gmra.mrb[0].mxu0 %v446
          %v482 = vpop.f32.mrb[0].mxu0
          %v483 = vadd.f32 0.0, %v482
          %v484 = vpop.f32.mrb[0].mxu0
          %v485 = vpop.f32.mrb[0].mxu0
          %v486 = vpop.f32.mrb[0].mxu0
          %487 = vdwg.mxu0
          %s488 = smul.u32 %s26, 8
          %s489 = scalar_lea.vmem [#allocation5], %s488
          %490 = vst.msk [vmem:[%s489] sm:$0xff] %vm444, %v483
          %v491 = vld [vmem:[#allocation7] sm:$0xff]
          %v492 = vsel %vm444, %v483, 0.0
          %493 = vadd.xlane.f32.xlu0 %v492
          %v494 = vpop.xlane.xlu0 %493
          %v495 = vadd.f32 %v491, %v494
          %vm496 = vcmask 7168
          %497 = vst.msk [vmem:[#allocation7] sm:$0xff] %vm496, %v495
          %v498 = vld [vmem:[#allocation8] sm:$0xff]
          %v499 = vmul.f32 %v483, %v483
          %v500 = vsel %vm444, %v499, 0.0
          %501 = vadd.xlane.f32.xlu0 %v500
          %v502 = vpop.xlane.xlu0 %501
          %v503 = vadd.f32 %v498, %v502
          %504 = vst.msk [vmem:[#allocation8] sm:$0xff] %vm496, %v503
        $region64: #{tpu_custom_call.1} parent=55 // pred_fallthru
          _
        %p505 = scmp.eq.s32.totalorder %s25, 1
        %p506 = pnand %p505, %p330
        %p507 = pneg %p506
        // Predicated region
        $region65: #{tpu_custom_call.1} parent=55 // pred_check
          _
        $region66: #{tpu_custom_call.1} parent=55 // pred_check_branch
          %509 = sbr.rel (%p506) target = $region68
        $region67: #{tpu_custom_call.1} parent=55 // pred_region
          %v510 = vld [vmem:[#allocation7] sm:$0xff]
          %v511 = vmul.f32 %v510, 0.015625
          %v512 = vld [vmem:[#allocation8] sm:$0xff]
          %v513 = vmul.f32 %v512, 0.015625
          %v514 = vmul.f32 %v511, %v511
          %v515 = vsub.f32 %v513, %v514
          %v516 = vmax.f32 %v515, 0.0
          %v517 = vld [vmem:[%s4] sm:$0xff]
          %v518 = vadd.f32 %v516, 1e-05
          %v519 = vrsqrt.pop %v518
          %v520 = vmul.f32 %v517, %v519
          %v521 = vld [vmem:[%s5] sm:$0xff]
          %v522 = vmul.f32 %v511, %v520
          %v523 = vsub.f32 %v521, %v522
          %v524 = vld [vmem:[#allocation5] sm:$0xff]
          %526 = vset.pattern.permute.xlu0 0
          %527 = vperm.xlu0 %526, %v520
          %v528 = vpop.permute.xlu0 %527
          %v530 = vmul.f32 %v524, %v528
          %532 = vset.pattern.permute.xlu0 0
          %533 = vperm.xlu0 %532, %v523
          %v534 = vpop.permute.xlu0 %533
          %v536 = vadd.f32 %v530, %v534
          %v537 = vmax.f32 %v536, 0.0
          %v538 = vpack.c.bf16 %v537, %v537
          %v539 = vld [vmem:[%s3] sm:$0xf]
          %vm540 = vcmask 64512
          %v542 = vsel %vm540, %v539, 0
          %vm544 = vcmask 1043456
          %v546 = vsel %vm544, %v538, 0
          %548 = vmatprep.subr.bf16.mxu0 0
          %549 = vmatpush1.bf16.msra.mxu0 %v546
          %550 = vmatprep.subr.bf16.mxu0 0
          %551 = vmatpush1.bf16.msra.mxu0 0
          %552 = vmatprep.subr.bf16.mxu0 0
          %553 = vmatpush1.bf16.msra.mxu0 0
          %554 = vmatprep.subr.bf16.mxu0 0
          %555 = vmatpush1.bf16.msra.mxu0 0
          %556 = vmatprep.subr.bf16.mxu0 0
          %557 = vmatpush1.bf16.msra.mxu0 0
          %558 = vmatprep.subr.bf16.mxu0 0
          %559 = vmatpush1.bf16.msra.mxu0 0
          %560 = vmatprep.subr.bf16.mxu0 0
          %561 = vmatpush1.bf16.msra.mxu0 0
          %562 = vmatprep.subr.bf16.mxu0 0
          %563 = vmatpush1.bf16.msra.mxu0 0
          %564 = vmatprep.subr.bf16.mxu0 0
          %565 = vmatpush1.bf16.msra.mxu0 0
          %566 = vmatprep.subr.bf16.mxu0 0
          %567 = vmatpush1.bf16.msra.mxu0 0
          %568 = vmatprep.subr.bf16.mxu0 0
          %569 = vmatpush1.bf16.msra.mxu0 0
          %570 = vmatprep.subr.bf16.mxu0 0
          %571 = vmatpush1.bf16.msra.mxu0 0
          %572 = vmatprep.subr.bf16.mxu0 0
          %573 = vmatpush1.bf16.msra.mxu0 0
          %574 = vmatprep.subr.bf16.mxu0 0
          %575 = vmatpush1.bf16.msra.mxu0 0
          %576 = vmatprep.subr.bf16.mxu0 0
          %577 = vmatpush1.bf16.msra.mxu0 0
          %578 = vmatprep.subr.bf16.mxu0 0
          %579 = vmatpush1.bf16.msra.mxu0 0
          %580 = vmatprep.mubr.bf16.mxu0 0
          %581 = vmatmul.mubr.bf16.gmra.mrb[0].mxu0 %v542
          %v582 = vpop.f32.mrb[0].mxu0
          %v583 = vadd.f32 0.0, %v582
          %v584 = vpop.f32.mrb[0].mxu0
          %v585 = vpop.f32.mrb[0].mxu0
          %v586 = vpop.f32.mrb[0].mxu0
          %587 = vdwg.mxu0
          %v588 = vpack.c.bf16 %v583, %v583
          %vm589 = vcmask 519168
          %590 = vst.msk [vmem:[#allocation3] sm:$0xf] %vm589, %v588
          %vm591 = vcmask 7168
          %592 = vst.msk [vmem:[#allocation7] sm:$0xff] %vm591, 0.0
          %593 = vst.msk [vmem:[#allocation8] sm:$0xff] %vm591, 0.0
        $region68: #{tpu_custom_call.1} parent=55 // pred_fallthru
          _
        // Predicated region
        $region69: #{tpu_custom_call.1} parent=55 // pred_check
          %p594 = pneg %p505
        $region70: #{tpu_custom_call.1} parent=55 // pred_check_branch
          %596 = sbr.rel (%p594) target = $region72
        $region71: #{tpu_custom_call.1} parent=55 // pred_region
          %v597 = vld [vmem:[#allocation3] sm:$0xf]
          %v598 = vld [vmem:[%s327] sm:$0xf]
          %v599 = vld [vmem:[%s327 + $0x4] sm:$0xf]
          %v600 = vld [vmem:[%s327 + $0x8] sm:$0xf]
          %v601 = vld [vmem:[%s327 + $0xc] sm:$0xf]
          %v602 = vld [vmem:[%s327 + $0x10] sm:$0xf]
          %v603 = vld [vmem:[%s327 + $0x14] sm:$0xf]
          %v604 = vld [vmem:[%s327 + $0x18] sm:$0xf]
          %v605 = vld [vmem:[%s327 + $0x1c] sm:$0xf]
          %v614 = vunpack.c.l.b16 %v598
          %v615 = vunpack.c.l.b16 %v599
          %v616 = vunpack.c.l.b16 %v600
          %v617 = vunpack.c.l.b16 %v601
          %v618 = vunpack.c.l.b16 %v602
          %v619 = vunpack.c.l.b16 %v603
          %v620 = vunpack.c.l.b16 %v604
          %v621 = vunpack.c.l.b16 %v605
          %v622 = vpack.c.b16 %v615, %v614
          %v623 = vpack.c.b16 %v617, %v616
          %v624 = vpack.c.b16 %v619, %v618
          %v625 = vpack.c.b16 %v621, %v620
          %vm630 = vcmask 523264
          %v632 = vsel %vm630, %v597, 0
          %634 = vmatprep.subr.bf16.mxu0 0
          %635 = vmatpush1.bf16.msra.mxu0 %v622
          %636 = vmatprep.subr.bf16.mxu0 0
          %637 = vmatpush1.bf16.msra.mxu0 %v623
          %638 = vmatprep.subr.bf16.mxu0 0
          %639 = vmatpush1.bf16.msra.mxu0 %v624
          %640 = vmatprep.subr.bf16.mxu0 0
          %641 = vmatpush1.bf16.msra.mxu0 %v625
          %642 = vmatprep.subr.bf16.mxu0 0
          %643 = vmatpush1.bf16.msra.mxu0 0
          %644 = vmatprep.subr.bf16.mxu0 0
          %645 = vmatpush1.bf16.msra.mxu0 0
          %646 = vmatprep.subr.bf16.mxu0 0
          %647 = vmatpush1.bf16.msra.mxu0 0
          %648 = vmatprep.subr.bf16.mxu0 0
          %649 = vmatpush1.bf16.msra.mxu0 0
          %650 = vmatprep.subr.bf16.mxu0 0
          %651 = vmatpush1.bf16.msra.mxu0 0
          %652 = vmatprep.subr.bf16.mxu0 0
          %653 = vmatpush1.bf16.msra.mxu0 0
          %654 = vmatprep.subr.bf16.mxu0 0
          %655 = vmatpush1.bf16.msra.mxu0 0
          %656 = vmatprep.subr.bf16.mxu0 0
          %657 = vmatpush1.bf16.msra.mxu0 0
          %658 = vmatprep.subr.bf16.mxu0 0
          %659 = vmatpush1.bf16.msra.mxu0 0
          %660 = vmatprep.subr.bf16.mxu0 0
          %661 = vmatpush1.bf16.msra.mxu0 0
          %662 = vmatprep.subr.bf16.mxu0 0
          %663 = vmatpush1.bf16.msra.mxu0 0
          %664 = vmatprep.subr.bf16.mxu0 0
          %665 = vmatpush1.bf16.msra.mxu0 0
          %666 = vmatprep.mubr.bf16.mxu0 0
          %667 = vmatmul.mubr.bf16.gmra.mrb[0].mxu0 %v632
          %v668 = vpop.f32.mrb[0].mxu0
          %v669 = vadd.f32 0.0, %v668
          %v670 = vpop.f32.mrb[0].mxu0
          %v671 = vpop.f32.mrb[0].mxu0
          %v672 = vpop.f32.mrb[0].mxu0
          %673 = vdwg.mxu0
          %s674 = smul.u32 %s26, 8
          %s675 = scalar_lea.vmem [#allocation6], %s674
          %676 = vst.msk [vmem:[%s675] sm:$0xff] %vm630, %v669
          %v677 = vld [vmem:[#allocation7] sm:$0xff]
          %v678 = vsel %vm630, %v669, 0.0
          %679 = vadd.xlane.f32.xlu0 %v678
          %v680 = vpop.xlane.xlu0 %679
          %v681 = vadd.f32 %v677, %v680
          %vm682 = vcmask 7168
          %683 = vst.msk [vmem:[#allocation7] sm:$0xff] %vm682, %v681
          %v684 = vld [vmem:[#allocation8] sm:$0xff]
          %v685 = vmul.f32 %v669, %v669
          %v686 = vsel %vm630, %v685, 0.0
          %687 = vadd.xlane.f32.xlu0 %v686
          %v688 = vpop.xlane.xlu0 %687
          %v689 = vadd.f32 %v684, %v688
          %690 = vst.msk [vmem:[#allocation8] sm:$0xff] %vm682, %v689
        $region72: #{tpu_custom_call.1} parent=55 // pred_fallthru
          _
        // Predicated region
        $region73: #{tpu_custom_call.1} parent=55 // pred_check
          _
        $region74: #{tpu_custom_call.1} parent=55 // pred_check_branch
          %692 = sbr.rel (%p506) target = $region76
        $region75: #{tpu_custom_call.1} parent=55 // pred_region
          %v693 = vld [vmem:[#allocation7] sm:$0xff]
          %v694 = vmul.f32 %v693, 0.015625
          %v695 = vld [vmem:[#allocation8] sm:$0xff]
          %v696 = vmul.f32 %v695, 0.015625
          %v697 = vmul.f32 %v694, %v694
          %v698 = vsub.f32 %v696, %v697
          %v699 = vmax.f32 %v698, 0.0
          %v700 = vld [vmem:[%s6] sm:$0xff]
          %v701 = vadd.f32 %v699, 1e-05
          %v702 = vrsqrt.pop %v701
          %v703 = vmul.f32 %v700, %v702
          %v704 = vld [vmem:[%s7] sm:$0xff]
          %v705 = vmul.f32 %v694, %v703
          %v706 = vsub.f32 %v704, %v705
          %v707 = vld [vmem:[#allocation6] sm:$0xff]
          %709 = vset.pattern.permute.xlu0 0
          %710 = vperm.xlu0 %709, %v703
          %v711 = vpop.permute.xlu0 %710
          %v713 = vmul.f32 %v707, %v711
          %715 = vset.pattern.permute.xlu0 0
          %716 = vperm.xlu0 %715, %v706
          %v717 = vpop.permute.xlu0 %716
          %v719 = vadd.f32 %v713, %v717
          %v720 = vld [vmem:[#allocation4] sm:$0xff]
          %v721 = vadd.f32 %v719, %v720
          %v722 = vmax.f32 %v721, 0.0
          %vm723 = vcmask 523264
          %724 = vst.msk [vmem:[#allocation9] sm:$0xff] %vm723, %v722
        $region76: #{tpu_custom_call.1} parent=55 // pred_fallthru
          _
        // Predicated region
        $region77: #{tpu_custom_call.1} parent=55 // pred_check
          %p725 = pneg %p240
        $region78: #{tpu_custom_call.1} parent=55 // pred_check_branch
          %727 = sbr.rel (%p725) target = $region80
        $region79: #{tpu_custom_call.1} parent=55 // pred_region
          %s729 = ssub.s32 128, 128
          %730 = vsyncadd [#allocation10], %s729
          %s732 = sshll.u32 [#allocation9], 4
          %s733 = int_to_ptr.vmem [resolvable:$true] %s732
          %735 = dma.vmem_to_hbm [thread:$0]  %s733, 128, %s9, [#allocation10]
        $region80: #{tpu_custom_call.1} parent=55 // pred_fallthru
          _
        // Predicated region
        $region81: #{tpu_custom_call.1} parent=55 // pred_check
          %p736 = pneg %p240
        $region82: #{tpu_custom_call.1} parent=55 // pred_check_branch
          %738 = sbr.rel (%p736) target = $region84
        $region83: #{tpu_custom_call.1} parent=55 // pred_region
          %739 = dma.done [#allocation10], 128
        $region84: #{tpu_custom_call.1} parent=55 // pred_fallthru
          _
      $region56: #{tpu_custom_call.1} parent=5 // pred_fallthru
        _
      %p740 = scmp.le.s32.totalorder 2, %s16
      // Predicated region
      $region85: #{tpu_custom_call.1} parent=5 // pred_check
        %p741 = pneg %p740
      $region86: #{tpu_custom_call.1} parent=5 // pred_check_branch
        %743 = sbr.rel (%p741) target = $region88
      $region87: #{tpu_custom_call.1} parent=5 // pred_region
        %s744 = ssub.s32 %s16, 2
      $region88: #{tpu_custom_call.1} parent=5 // pred_fallthru
        _
    $region6: #{tpu_custom_call.1} parent=1 // loop_footer
      %s20 = sadd.s32 1, %s16
    $region7: #{tpu_custom_call.1} parent=1 // loop_footer_branch
      %15 = sbr.rel target = $region3
    $region8: #{tpu_custom_call.1} parent=1 // loop_exit
      _
    %745 = vsyncpa [#allocation10], 1
    %s746 = scalar_lea.sflag [#allocation10], 1
    %747 = vsyncpa %s746, 1

</llo_original>
